<compile_context>
chip_gen: v7x
topology: tpu7x:2x2x1
jax: 0.10.0
libtpu: 0.0.40
codegen_flags: <defaults>
</compile_context>

<pallas_src>
import functools

import jax
import jax.numpy as jnp
import numpy as np
from jax.experimental import pallas as pl
from jax.experimental.pallas import tpu as pltpu


# ------------------------------ fused kernel --------------------------------


def _inverted_block_kernel(*refs, stride, use_res, has_expand):
    if has_expand:
        (x_ref, w_exp_ref, b_exp_ref, w_dw_ref, b_dw_ref,
         w_proj_ref, b_proj_ref, o_ref, hp_ref) = refs
    else:
        (x_ref, w_dw_ref, b_dw_ref, w_proj_ref, b_proj_ref,
         o_ref, hp_ref) = refs

    _, H, W, Cin = x_ref.shape
    _, Ho, Wo, Cout = o_ref.shape
    hidden = w_dw_ref.shape[-1]

    x = x_ref[0]                                   # (H, W, Cin)

    # ---- 1x1 expand (BN scale pre-folded into weight) + shift + ReLU6 ----
    if has_expand:
        x2d = x.reshape(H * W, Cin)
        h2d = jnp.dot(x2d, w_exp_ref[...], preferred_element_type=jnp.float32)
        h2d = jnp.clip(h2d + b_exp_ref[...], 0.0, 6.0)
        h = h2d.reshape(H, W, hidden)
    else:
        h = x

    # ---- in-VMEM zero padding (pad=1) for the 3x3 depthwise conv ----
    hp_ref[...] = jnp.zeros_like(hp_ref)
    hp_ref[1:H + 1, 1:W + 1, :] = h

    # ---- 3x3 depthwise conv (stride s) + BN shift + ReLU6 ----
    w_dw = w_dw_ref[...]                           # (3, 3, hidden)
    acc = jnp.zeros((Ho, Wo, hidden), jnp.float32)
    for kh in range(3):
        for kw in range(3):
            if stride == 1:
                tap = hp_ref[kh:kh + Ho, kw:kw + Wo, :]
            else:
                tap = hp_ref[pl.ds(kh, Ho, stride), pl.ds(kw, Wo, stride), :]
            acc = acc + tap * w_dw[kh, kw]
    hdw = jnp.clip(acc + b_dw_ref[...], 0.0, 6.0)  # (Ho, Wo, hidden)

    # ---- 1x1 project (BN scale pre-folded) + shift + ReLU6 (+ residual) ----
    o2d = jnp.dot(hdw.reshape(Ho * Wo, hidden), w_proj_ref[...],
                  preferred_element_type=jnp.float32)
    o2d = jnp.clip(o2d + b_proj_ref[...], 0.0, 6.0)
    o = o2d.reshape(Ho, Wo, Cout)
    if use_res:
        o = o + x                                  # stride==1 and Cin==Cout
    o_ref[0] = o


# ------------------------------ parameters ----------------------------------


def _bn_fold(C):
    # Deterministic BN params (inference form) -> per-channel scale / shift.
    gamma = 1.0 + 0.01 * jnp.arange(C, dtype=jnp.float32)
    beta = 0.02 * jnp.arange(C, dtype=jnp.float32)
    mean = 0.01 * jnp.arange(C, dtype=jnp.float32)
    var = 1.0 + 0.05 * jnp.arange(C, dtype=jnp.float32)
    eps = 1e-5
    scale = gamma / jnp.sqrt(var + eps)
    shift = beta - mean * scale
    return scale, shift


def init_params(key, ch_in, ch_out, expand_ratio):
    hidden = ch_in * expand_ratio
    k1, k2, k3 = jax.random.split(key, 3)
    params = {}
    if expand_ratio != 1:
        w_exp = 0.1 * jax.random.normal(k1, (ch_in, hidden), jnp.float32)
        s, b = _bn_fold(hidden)
        params["w_exp"] = w_exp * s[None, :]       # fold BN scale into weight
        params["b_exp"] = b
    w_dw = 0.1 * jax.random.normal(k2, (3, 3, hidden), jnp.float32)
    s, b = _bn_fold(hidden)
    params["w_dw"] = w_dw * s[None, None, :]
    params["b_dw"] = b
    w_proj = 0.1 * jax.random.normal(k3, (hidden, ch_out), jnp.float32)
    s, b = _bn_fold(ch_out)
    params["w_proj"] = w_proj * s[None, :]
    params["b_proj"] = b
    return params


# ------------------------------- forward ------------------------------------


def inverted_block_forward(x_nchw, params, *, ch_in, ch_out, expand_ratio, stride):
    assert stride in (1, 2)
    x = jnp.transpose(x_nchw, (0, 2, 3, 1)).astype(jnp.float32)   # NCHW -> NHWC
    N, H, W, _ = x.shape
    hidden = ch_in * expand_ratio
    Ho = (H - 1) // stride + 1                    # k=3, pad=1
    Wo = (W - 1) // stride + 1
    use_res = (stride == 1 and ch_in == ch_out)
    has_expand = expand_ratio != 1

    args = [x]
    in_specs = [pl.BlockSpec((1, H, W, ch_in), lambda n: (n, 0, 0, 0))]
    if has_expand:
        args += [params["w_exp"], params["b_exp"].reshape(1, hidden)]
        in_specs += [pl.BlockSpec((ch_in, hidden), lambda n: (0, 0)),
                     pl.BlockSpec((1, hidden), lambda n: (0, 0))]
    args += [params["w_dw"], params["b_dw"].reshape(1, hidden),
             params["w_proj"], params["b_proj"].reshape(1, ch_out)]
    in_specs += [pl.BlockSpec((3, 3, hidden), lambda n: (0, 0, 0)),
                 pl.BlockSpec((1, hidden), lambda n: (0, 0)),
                 pl.BlockSpec((hidden, ch_out), lambda n: (0, 0)),
                 pl.BlockSpec((1, ch_out), lambda n: (0, 0))]

    kernel = functools.partial(_inverted_block_kernel, stride=stride,
                               use_res=use_res, has_expand=has_expand)

    # --- VMEM budget estimate (double-buffered tiles + weights + scratch) ---
    f = 4  # float32
    tiles = (H * W * ch_in + Ho * Wo * ch_out) * f * 2
    weights = ((ch_in * hidden if has_expand else 0) + 9 * hidden
               + hidden * ch_out + 2 * hidden + ch_out) * f * 2
    scratch = (H + 2) * (W + 2) * hidden * f
    live = (H * W * hidden + Ho * Wo * hidden) * f * 2
    needed = tiles + weights + scratch + live
    vmem_limit_bytes = int(min(max(2 * needed, 16 * 2 ** 20), 64 * 2 ** 20))

    # --- advisory cost estimate for XLA scheduling ---
    flops = 2 * N * Ho * Wo * hidden * (9 + ch_out)
    if has_expand:
        flops += 2 * N * H * W * ch_in * hidden
    bytes_accessed = (x.size + N * Ho * Wo * ch_out
                      + (ch_in * hidden if has_expand else 0)
                      + 9 * hidden + hidden * ch_out
                      + 2 * hidden + ch_out) * f

    out_nhwc = pl.pallas_call(
        kernel,
        grid=(N,),
        in_specs=in_specs,
        out_specs=pl.BlockSpec((1, Ho, Wo, ch_out), lambda n: (n, 0, 0, 0)),
        out_shape=jax.ShapeDtypeStruct((N, Ho, Wo, ch_out), jnp.float32),
        scratch_shapes=[pltpu.VMEM((H + 2, W + 2, hidden), jnp.float32)],
        compiler_params=pltpu.CompilerParams(
            dimension_semantics=("parallel",),
            vmem_limit_bytes=vmem_limit_bytes),
        cost_estimate=pl.CostEstimate(flops=int(flops), transcendentals=0,
                                      bytes_accessed=int(bytes_accessed)),
    )(*args)
    # TODO(synk): for very small ch_out (<128) the final store is lane-masked;
    # a lane-dense repack of the output was left out to keep semantics 1:1.
    return jnp.transpose(out_nhwc, (0, 3, 1, 2))  # NHWC -> NCHW


# ------------------------------ reference ------------------------------------


def _reference(x_nchw, params, *, ch_in, ch_out, expand_ratio, stride):
    # Pure-JAX NHWC reference (same folded-BN math) for a correctness check.
    def relu6(v):
        return jnp.clip(v, 0.0, 6.0)

    x = jnp.transpose(x_nchw, (0, 2, 3, 1)).astype(jnp.float32)
    h = x
    if expand_ratio != 1:
        h = relu6(jnp.einsum("nhwc,cd->nhwd", h, params["w_exp"]) + params["b_exp"])
    C = h.shape[-1]
    w_dw = params["w_dw"][:, :, None, :]          # (3, 3, 1, C) HWIO depthwise
    dw = jax.lax.conv_general_dilated(
        h, w_dw, window_strides=(stride, stride), padding=((1, 1), (1, 1)),
        dimension_numbers=("NHWC", "HWIO", "NHWC"), feature_group_count=C)
    h = relu6(dw + params["b_dw"])
    o = relu6(jnp.einsum("nhwc,cd->nhwd", h, params["w_proj"]) + params["b_proj"])
    if stride == 1 and ch_in == ch_out:
        o = x + o
    return jnp.transpose(o, (0, 3, 1, 2))


# --------------------------------- main --------------------------------------

if __name__ == "__main__":
    key = jax.random.PRNGKey(0)

    # Case 1: residual path (stride=1, ch_in==ch_out), expand_ratio=2.
    ch_in, ch_out, expand_ratio, stride = 8, 8, 2, 1
    N, H, W = 2, 8, 8
    k_x, k_p, key = jax.random.split(key, 3)
    x = jax.random.normal(k_x, (N, ch_in, H, W), jnp.float32)     # NCHW
    params = init_params(k_p, ch_in, ch_out, expand_ratio)
    out = inverted_block_forward(
        x, params, ch_in=ch_in, ch_out=ch_out, expand_ratio=expand_ratio, stride=stride)
    out = jax.block_until_ready(out)
    ref = _reference(
        x, params, ch_in=ch_in, ch_out=ch_out, expand_ratio=expand_ratio, stride=stride)
    np.testing.assert_allclose(np.asarray(out), np.asarray(ref), rtol=2e-4, atol=2e-4)
    assert out.shape == (N, ch_out, H // stride, W // stride)

    # Case 2: strided, channel-changing path (no residual), expand_ratio=6.
    ch_in, ch_out, expand_ratio, stride = 8, 16, 6, 2
    N, H, W = 2, 16, 16
    k_x, k_p, key = jax.random.split(key, 3)
    x = jax.random.normal(k_x, (N, ch_in, H, W), jnp.float32)
    params = init_params(k_p, ch_in, ch_out, expand_ratio)
    out = inverted_block_forward(
        x, params, ch_in=ch_in, ch_out=ch_out, expand_ratio=expand_ratio, stride=stride)
    out = jax.block_until_ready(out)
    ref = _reference(
        x, params, ch_in=ch_in, ch_out=ch_out, expand_ratio=expand_ratio, stride=stride)
    np.testing.assert_allclose(np.asarray(out), np.asarray(ref), rtol=2e-4, atol=2e-4)
    assert out.shape == (N, ch_out, H // stride, W // stride)

    print("KERNEL_OK")
</pallas_src>

<mosaic_0001>
module attributes {stable_mosaic.version = 11 : i64} {
  func.func @_inverted_block_kernel(%arg0: i32, %arg1: memref<1x8x8x8xf32, #tpu.memory_space<vmem>>, %arg2: memref<8x16xf32, #tpu.memory_space<vmem>>, %arg3: memref<1x16xf32, #tpu.memory_space<vmem>>, %arg4: memref<3x3x16xf32, #tpu.memory_space<vmem>>, %arg5: memref<1x16xf32, #tpu.memory_space<vmem>>, %arg6: memref<16x8xf32, #tpu.memory_space<vmem>>, %arg7: memref<1x8xf32, #tpu.memory_space<vmem>>, %arg8: memref<1x8x8x8xf32, #tpu.memory_space<vmem>>, %arg9: memref<10x10x16xf32, #tpu.memory_space<vmem>>) attributes {dimension_semantics = [#tpu.dimension_semantics<parallel>], iteration_bounds = array<i64: 2>, scalar_prefetch = 0 : i64, scratch_operands = 1 : i64, tpu.core_type = #tpu.core_type<tc>, window_params = [{transform_indices = @transform_0, window_bounds = array<i64: 1, 8, 8, 8>}, {pipeline_mode = #tpu.pipeline_mode<synchronous>, transform_indices = @transform_1, window_bounds = array<i64: 8, 16>}, {pipeline_mode = #tpu.pipeline_mode<synchronous>, transform_indices = @transform_2, window_bounds = array<i64: 1, 16>}, {pipeline_mode = #tpu.pipeline_mode<synchronous>, transform_indices = @transform_3, window_bounds = array<i64: 3, 3, 16>}, {pipeline_mode = #tpu.pipeline_mode<synchronous>, transform_indices = @transform_4, window_bounds = array<i64: 1, 16>}, {pipeline_mode = #tpu.pipeline_mode<synchronous>, transform_indices = @transform_5, window_bounds = array<i64: 16, 8>}, {pipeline_mode = #tpu.pipeline_mode<synchronous>, transform_indices = @transform_6, window_bounds = array<i64: 1, 8>}, {transform_indices = @transform_7, window_bounds = array<i64: 1, 8, 8, 8>}]} {
    %c0 = arith.constant 0 : index
    %c0_0 = arith.constant 0 : index
    %c0_1 = arith.constant 0 : index
    %c0_2 = arith.constant 0 : index
    %0 = vector.load %arg1[%c0, %c0_0, %c0_1, %c0_2] : memref<1x8x8x8xf32, #tpu.memory_space<vmem>>, vector<1x8x8x8xf32>
    %1 = vector.shape_cast %0 : vector<1x8x8x8xf32> to vector<8x8x8xf32>
    %2 = vector.shape_cast %1 : vector<8x8x8xf32> to vector<64x8xf32>
    %c0_3 = arith.constant 0 : index
    %c0_4 = arith.constant 0 : index
    %3 = vector.load %arg2[%c0_3, %c0_4] : memref<8x16xf32, #tpu.memory_space<vmem>>, vector<8x16xf32>
    %cst = arith.constant dense<0.000000e+00> : vector<64x16xf32>
    %4 = tpu.matmul %2, %3, %cst {dimension_numbers = #tpu.dot_dimension_numbers<[1], [0], [0], [1], [0, 0, 1, 1], [], []>} : vector<64x8xf32>, vector<8x16xf32>, vector<64x16xf32> -> vector<64x16xf32>
    %c0_5 = arith.constant 0 : index
    %c0_6 = arith.constant 0 : index
    %5 = vector.load %arg3[%c0_5, %c0_6] : memref<1x16xf32, #tpu.memory_space<vmem>>, vector<1x16xf32>
    %6 = vector.broadcast %5 : vector<1x16xf32> to vector<64x16xf32>
    %7 = arith.addf %4, %6 : vector<64x16xf32>
    %cst_7 = arith.constant 0.000000e+00 : f32
    %cst_8 = arith.constant 6.000000e+00 : f32
    %8 = vector.broadcast %cst_7 : f32 to vector<64x16xf32>
    %9 = arith.maximumf %8, %7 : vector<64x16xf32>
    %10 = vector.broadcast %cst_8 : f32 to vector<64x16xf32>
    %11 = arith.minimumf %10, %9 : vector<64x16xf32>
    %12 = vector.shape_cast %11 : vector<64x16xf32> to vector<8x8x16xf32>
    %cst_9 = arith.constant 0.000000e+00 : f32
    %13 = vector.broadcast %cst_9 : f32 to vector<10x10x16xf32>
    %c0_10 = arith.constant 0 : index
    %c0_11 = arith.constant 0 : index
    %c0_12 = arith.constant 0 : index
    %14 = vector.load %arg9[%c0_10, %c0_11, %c0_12] : memref<10x10x16xf32, #tpu.memory_space<vmem>>, vector<10x10x16xf32>
    tpu.vector_store %arg9[%c0_10, %c0_11, %c0_12], %13 {strides = array<i32>} : memref<10x10x16xf32, #tpu.memory_space<vmem>>, vector<10x10x16xf32>,
    %c1 = arith.constant 1 : index
    %c1_13 = arith.constant 1 : index
    %c0_14 = arith.constant 0 : index
    %15 = vector.load %arg9[%c1, %c1_13, %c0_14] : memref<10x10x16xf32, #tpu.memory_space<vmem>>, vector<8x8x16xf32>
    tpu.vector_store %arg9[%c1, %c1_13, %c0_14], %12 {strides = array<i32>} : memref<10x10x16xf32, #tpu.memory_space<vmem>>, vector<8x8x16xf32>,
    %c0_15 = arith.constant 0 : index
    %c0_16 = arith.constant 0 : index
    %c0_17 = arith.constant 0 : index
    %16 = vector.load %arg4[%c0_15, %c0_16, %c0_17] : memref<3x3x16xf32, #tpu.memory_space<vmem>>, vector<3x3x16xf32>
    %cst_18 = arith.constant 0.000000e+00 : f32
    %17 = vector.broadcast %cst_18 : f32 to vector<8x8x16xf32>
    %c0_19 = arith.constant 0 : index
    %c0_20 = arith.constant 0 : index
    %c0_21 = arith.constant 0 : index
    %18 = vector.load %arg9[%c0_19, %c0_20, %c0_21] : memref<10x10x16xf32, #tpu.memory_space<vmem>>, vector<8x8x16xf32>
    %19 = vector.extract_strided_slice %16 {offsets = [0, 0, 0], sizes = [1, 1, 16], strides = [1, 1, 1]} : vector<3x3x16xf32> to vector<1x1x16xf32>
    %20 = vector.shape_cast %19 : vector<1x1x16xf32> to vector<16xf32>
    %21 = vector.shape_cast %20 : vector<16xf32> to vector<1x1x16xf32>
    %22 = vector.broadcast %21 : vector<1x1x16xf32> to vector<8x8x16xf32>
    %23 = arith.mulf %18, %22 : vector<8x8x16xf32>
    %24 = arith.addf %17, %23 : vector<8x8x16xf32>
    %c0_22 = arith.constant 0 : index
    %c1_23 = arith.constant 1 : index
    %c0_24 = arith.constant 0 : index
    %25 = vector.load %arg9[%c0_22, %c1_23, %c0_24] : memref<10x10x16xf32, #tpu.memory_space<vmem>>, vector<8x8x16xf32>
    %26 = vector.extract_strided_slice %16 {offsets = [0, 1, 0], sizes = [1, 1, 16], strides = [1, 1, 1]} : vector<3x3x16xf32> to vector<1x1x16xf32>
    %27 = vector.shape_cast %26 : vector<1x1x16xf32> to vector<16xf32>
    %28 = vector.shape_cast %27 : vector<16xf32> to vector<1x1x16xf32>
    %29 = vector.broadcast %28 : vector<1x1x16xf32> to vector<8x8x16xf32>
    %30 = arith.mulf %25, %29 : vector<8x8x16xf32>
    %31 = arith.addf %24, %30 : vector<8x8x16xf32>
    %c0_25 = arith.constant 0 : index
    %c2 = arith.constant 2 : index
    %c0_26 = arith.constant 0 : index
    %32 = vector.load %arg9[%c0_25, %c2, %c0_26] : memref<10x10x16xf32, #tpu.memory_space<vmem>>, vector<8x8x16xf32>
    %33 = vector.extract_strided_slice %16 {offsets = [0, 2, 0], sizes = [1, 1, 16], strides = [1, 1, 1]} : vector<3x3x16xf32> to vector<1x1x16xf32>
    %34 = vector.shape_cast %33 : vector<1x1x16xf32> to vector<16xf32>
    %35 = vector.shape_cast %34 : vector<16xf32> to vector<1x1x16xf32>
    %36 = vector.broadcast %35 : vector<1x1x16xf32> to vector<8x8x16xf32>
    %37 = arith.mulf %32, %36 : vector<8x8x16xf32>
    %38 = arith.addf %31, %37 : vector<8x8x16xf32>
    %c1_27 = arith.constant 1 : index
    %c0_28 = arith.constant 0 : index
    %c0_29 = arith.constant 0 : index
    %39 = vector.load %arg9[%c1_27, %c0_28, %c0_29] : memref<10x10x16xf32, #tpu.memory_space<vmem>>, vector<8x8x16xf32>
    %40 = vector.extract_strided_slice %16 {offsets = [1, 0, 0], sizes = [1, 1, 16], strides = [1, 1, 1]} : vector<3x3x16xf32> to vector<1x1x16xf32>
    %41 = vector.shape_cast %40 : vector<1x1x16xf32> to vector<16xf32>
    %42 = vector.shape_cast %41 : vector<16xf32> to vector<1x1x16xf32>
    %43 = vector.broadcast %42 : vector<1x1x16xf32> to vector<8x8x16xf32>
    %44 = arith.mulf %39, %43 : vector<8x8x16xf32>
    %45 = arith.addf %38, %44 : vector<8x8x16xf32>
    %c1_30 = arith.constant 1 : index
    %c1_31 = arith.constant 1 : index
    %c0_32 = arith.constant 0 : index
    %46 = vector.load %arg9[%c1_30, %c1_31, %c0_32] : memref<10x10x16xf32, #tpu.memory_space<vmem>>, vector<8x8x16xf32>
    %47 = vector.extract_strided_slice %16 {offsets = [1, 1, 0], sizes = [1, 1, 16], strides = [1, 1, 1]} : vector<3x3x16xf32> to vector<1x1x16xf32>
    %48 = vector.shape_cast %47 : vector<1x1x16xf32> to vector<16xf32>
    %49 = vector.shape_cast %48 : vector<16xf32> to vector<1x1x16xf32>
    %50 = vector.broadcast %49 : vector<1x1x16xf32> to vector<8x8x16xf32>
    %51 = arith.mulf %46, %50 : vector<8x8x16xf32>
    %52 = arith.addf %45, %51 : vector<8x8x16xf32>
    %c1_33 = arith.constant 1 : index
    %c2_34 = arith.constant 2 : index
    %c0_35 = arith.constant 0 : index
    %53 = vector.load %arg9[%c1_33, %c2_34, %c0_35] : memref<10x10x16xf32, #tpu.memory_space<vmem>>, vector<8x8x16xf32>
    %54 = vector.extract_strided_slice %16 {offsets = [1, 2, 0], sizes = [1, 1, 16], strides = [1, 1, 1]} : vector<3x3x16xf32> to vector<1x1x16xf32>
    %55 = vector.shape_cast %54 : vector<1x1x16xf32> to vector<16xf32>
    %56 = vector.shape_cast %55 : vector<16xf32> to vector<1x1x16xf32>
    %57 = vector.broadcast %56 : vector<1x1x16xf32> to vector<8x8x16xf32>
    %58 = arith.mulf %53, %57 : vector<8x8x16xf32>
    %59 = arith.addf %52, %58 : vector<8x8x16xf32>
    %c2_36 = arith.constant 2 : index
    %c0_37 = arith.constant 0 : index
    %c0_38 = arith.constant 0 : index
    %60 = vector.load %arg9[%c2_36, %c0_37, %c0_38] : memref<10x10x16xf32, #tpu.memory_space<vmem>>, vector<8x8x16xf32>
    %61 = vector.extract_strided_slice %16 {offsets = [2, 0, 0], sizes = [1, 1, 16], strides = [1, 1, 1]} : vector<3x3x16xf32> to vector<1x1x16xf32>
    %62 = vector.shape_cast %61 : vector<1x1x16xf32> to vector<16xf32>
    %63 = vector.shape_cast %62 : vector<16xf32> to vector<1x1x16xf32>
    %64 = vector.broadcast %63 : vector<1x1x16xf32> to vector<8x8x16xf32>
    %65 = arith.mulf %60, %64 : vector<8x8x16xf32>
    %66 = arith.addf %59, %65 : vector<8x8x16xf32>
    %c2_39 = arith.constant 2 : index
    %c1_40 = arith.constant 1 : index
    %c0_41 = arith.constant 0 : index
    %67 = vector.load %arg9[%c2_39, %c1_40, %c0_41] : memref<10x10x16xf32, #tpu.memory_space<vmem>>, vector<8x8x16xf32>
    %68 = vector.extract_strided_slice %16 {offsets = [2, 1, 0], sizes = [1, 1, 16], strides = [1, 1, 1]} : vector<3x3x16xf32> to vector<1x1x16xf32>
    %69 = vector.shape_cast %68 : vector<1x1x16xf32> to vector<16xf32>
    %70 = vector.shape_cast %69 : vector<16xf32> to vector<1x1x16xf32>
    %71 = vector.broadcast %70 : vector<1x1x16xf32> to vector<8x8x16xf32>
    %72 = arith.mulf %67, %71 : vector<8x8x16xf32>
    %73 = arith.addf %66, %72 : vector<8x8x16xf32>
    %c2_42 = arith.constant 2 : index
    %c2_43 = arith.constant 2 : index
    %c0_44 = arith.constant 0 : index
    %74 = vector.load %arg9[%c2_42, %c2_43, %c0_44] : memref<10x10x16xf32, #tpu.memory_space<vmem>>, vector<8x8x16xf32>
    %75 = vector.extract_strided_slice %16 {offsets = [2, 2, 0], sizes = [1, 1, 16], strides = [1, 1, 1]} : vector<3x3x16xf32> to vector<1x1x16xf32>
    %76 = vector.shape_cast %75 : vector<1x1x16xf32> to vector<16xf32>
    %77 = vector.shape_cast %76 : vector<16xf32> to vector<1x1x16xf32>
    %78 = vector.broadcast %77 : vector<1x1x16xf32> to vector<8x8x16xf32>
    %79 = arith.mulf %74, %78 : vector<8x8x16xf32>
    %80 = arith.addf %73, %79 : vector<8x8x16xf32>
    %c0_45 = arith.constant 0 : index
    %c0_46 = arith.constant 0 : index
    %81 = vector.load %arg5[%c0_45, %c0_46] : memref<1x16xf32, #tpu.memory_space<vmem>>, vector<1x16xf32>
    %82 = vector.shape_cast %81 : vector<1x16xf32> to vector<1x1x16xf32>
    %83 = vector.broadcast %82 : vector<1x1x16xf32> to vector<8x8x16xf32>
    %84 = arith.addf %80, %83 : vector<8x8x16xf32>
    %cst_47 = arith.constant 0.000000e+00 : f32
    %cst_48 = arith.constant 6.000000e+00 : f32
    %85 = vector.broadcast %cst_47 : f32 to vector<8x8x16xf32>
    %86 = arith.maximumf %85, %84 : vector<8x8x16xf32>
    %87 = vector.broadcast %cst_48 : f32 to vector<8x8x16xf32>
    %88 = arith.minimumf %87, %86 : vector<8x8x16xf32>
    %89 = vector.shape_cast %88 : vector<8x8x16xf32> to vector<64x16xf32>
    %c0_49 = arith.constant 0 : index
    %c0_50 = arith.constant 0 : index
    %90 = vector.load %arg6[%c0_49, %c0_50] : memref<16x8xf32, #tpu.memory_space<vmem>>, vector<16x8xf32>
    %cst_51 = arith.constant dense<0.000000e+00> : vector<64x8xf32>
    %91 = tpu.matmul %89, %90, %cst_51 {dimension_numbers = #tpu.dot_dimension_numbers<[1], [0], [0], [1], [0, 0, 1, 1], [], []>} : vector<64x16xf32>, vector<16x8xf32>, vector<64x8xf32> -> vector<64x8xf32>
    %c0_52 = arith.constant 0 : index
    %c0_53 = arith.constant 0 : index
    %92 = vector.load %arg7[%c0_52, %c0_53] : memref<1x8xf32, #tpu.memory_space<vmem>>, vector<1x8xf32>
    %93 = vector.broadcast %92 : vector<1x8xf32> to vector<64x8xf32>
    %94 = arith.addf %91, %93 : vector<64x8xf32>
    %cst_54 = arith.constant 0.000000e+00 : f32
    %cst_55 = arith.constant 6.000000e+00 : f32
    %95 = vector.broadcast %cst_54 : f32 to vector<64x8xf32>
    %96 = arith.maximumf %95, %94 : vector<64x8xf32>
    %97 = vector.broadcast %cst_55 : f32 to vector<64x8xf32>
    %98 = arith.minimumf %97, %96 : vector<64x8xf32>
    %99 = vector.shape_cast %98 : vector<64x8xf32> to vector<8x8x8xf32>
    %100 = arith.addf %99, %1 : vector<8x8x8xf32>
    %c0_56 = arith.constant 0 : index
    %c0_57 = arith.constant 0 : index
    %c0_58 = arith.constant 0 : index
    %c0_59 = arith.constant 0 : index
    %101 = vector.load %arg8[%c0_56, %c0_57, %c0_58, %c0_59] : memref<1x8x8x8xf32, #tpu.memory_space<vmem>>, vector<1x8x8x8xf32>
    %102 = vector.shape_cast %101 : vector<1x8x8x8xf32> to vector<8x8x8xf32>
    %103 = vector.shape_cast %100 : vector<8x8x8xf32> to vector<1x8x8x8xf32>
    tpu.vector_store %arg8[%c0_56, %c0_57, %c0_58, %c0_59], %103 {strides = array<i32>} : memref<1x8x8x8xf32, #tpu.memory_space<vmem>>, vector<1x8x8x8xf32>,
    return
  }
  func.func @transform_0(%arg0: i32) -> (i32, i32, i32, i32) {
    %c0_i32 = arith.constant 0 : i32
    %c0_i32_0 = arith.constant 0 : i32
    %c0_i32_1 = arith.constant 0 : i32
    %c0_i32_2 = arith.constant 0 : i32
    return %arg0, %c0_i32, %c0_i32_0, %c0_i32_1 : i32, i32, i32, i32
  }
  func.func @transform_1(%arg0: i32) -> (i32, i32) {
    %c0_i32 = arith.constant 0 : i32
    %c0_i32_0 = arith.constant 0 : i32
    %c0_i32_1 = arith.constant 0 : i32
    return %c0_i32, %c0_i32_0 : i32, i32
  }
  func.func @transform_2(%arg0: i32) -> (i32, i32) {
    %c0_i32 = arith.constant 0 : i32
    %c0_i32_0 = arith.constant 0 : i32
    %c0_i32_1 = arith.constant 0 : i32
    return %c0_i32, %c0_i32_0 : i32, i32
  }
  func.func @transform_3(%arg0: i32) -> (i32, i32, i32) {
    %c0_i32 = arith.constant 0 : i32
    %c0_i32_0 = arith.constant 0 : i32
    %c0_i32_1 = arith.constant 0 : i32
    %c0_i32_2 = arith.constant 0 : i32
    return %c0_i32, %c0_i32_0, %c0_i32_1 : i32, i32, i32
  }
  func.func @transform_4(%arg0: i32) -> (i32, i32) {
    %c0_i32 = arith.constant 0 : i32
    %c0_i32_0 = arith.constant 0 : i32
    %c0_i32_1 = arith.constant 0 : i32
    return %c0_i32, %c0_i32_0 : i32, i32
  }
  func.func @transform_5(%arg0: i32) -> (i32, i32) {
    %c0_i32 = arith.constant 0 : i32
    %c0_i32_0 = arith.constant 0 : i32
    %c0_i32_1 = arith.constant 0 : i32
    return %c0_i32, %c0_i32_0 : i32, i32
  }
  func.func @transform_6(%arg0: i32) -> (i32, i32) {
    %c0_i32 = arith.constant 0 : i32
    %c0_i32_0 = arith.constant 0 : i32
    %c0_i32_1 = arith.constant 0 : i32
    return %c0_i32, %c0_i32_0 : i32, i32
  }
  func.func @transform_7(%arg0: i32) -> (i32, i32, i32, i32) {
    %c0_i32 = arith.constant 0 : i32
    %c0_i32_0 = arith.constant 0 : i32
    %c0_i32_1 = arith.constant 0 : i32
    %c0_i32_2 = arith.constant 0 : i32
    return %arg0, %c0_i32, %c0_i32_0, %c0_i32_1 : i32, i32, i32, i32
  }
}

</mosaic_0001>

<llo_original>
// kernel: tpu_custom_call.1
$region0: #{tpu_custom_call.1}
  #allocation0 [shape = 'u32[]', space=smem, size = 0x4, offset = 0x4, fixed_abs, tag = 'smem constant byte address 0x4 - core index']
  #allocation1 [shape = 'u32[144,128]{1,0:T(1,128)}', space=vmem, size = 0x12000, scoped, tag = 'internal scratch']
  #allocation2 [shape = 'f32[10,10,16]{2,1,0:T(8,128)}', space=vmem, size = 0x14000, scoped, tag = 'scratch operand']
  %s0 = inlined_call_operand.hbm [shape: f32[2,8,8,8], index: 0, kind: input, shape index: {}]
  %s1 = inlined_call_operand.vmem [shape: f32[8,16], index: 1, kind: input, shape index: {}]
  %s2 = inlined_call_operand.vmem [shape: f32[1,16], index: 2, kind: input, shape index: {}]
  %s3 = inlined_call_operand.vmem [shape: f32[3,3,16], index: 3, kind: input, shape index: {}]
  %s4 = inlined_call_operand.vmem [shape: f32[1,16], index: 4, kind: input, shape index: {}]
  %s5 = inlined_call_operand.vmem [shape: f32[16,8], index: 5, kind: input, shape index: {}]
  %s6 = inlined_call_operand.vmem [shape: f32[1,8], index: 6, kind: input, shape index: {}]
  %s7 = inlined_call_operand.hbm [shape: f32[2,8,8,8], index: 7, kind: output, shape index: {}]
  %s8 = sld [smem:[#allocation0]]
  $region65: #{tpu_custom_call.1} parent=0
    _
  %s10 = ssub.s32 1, %s8
  %s11 = scalar_select 0, %s10, %s8
  $region1: #{tpu_custom_call.1} parent=0
    #allocation3 [shape = 'u8[65536]{0}', space=vmem, size = 0x10000, scoped, tag = 'input window, operand 0']
    #allocation4 [shape = 's32[2]{0}', space=sflag, size = 0x8, scoped, tag = 'scoped memory for tpu_custom_call.1']
    #allocation5 [shape = 's32[2]{0}', space=sflag, size = 0x8, scoped, tag = 'scoped memory for tpu_custom_call.1']
    #allocation6 [shape = 'u8[65536]{0}', space=vmem, size = 0x10000, scoped, tag = 'output window, operand 0']
    %12 = vsyncpa [#allocation4], 0
    %s13 = scalar_lea.sflag [#allocation4], 1
    %14 = vsyncpa %s13, 0
    %15 = vsyncpa [#allocation5], 0
    %s16 = scalar_lea.sflag [#allocation5], 1
    %17 = vsyncpa %s16, 0
    loop: start=0, step=1, limit=4
    $region2: #{tpu_custom_call.1} parent=1 // loop_pre_header
      _
    $region3: #{tpu_custom_call.1} parent=1 // loop_header
      %s19 = sphi 0, %s23
      %p20 = scmp.ge.s32.totalorder %s19, 4
      %s29 = sphi 0, %s31
      %s32 = sphi 0, %s29
      %s33 = sphi 0, %s32
      %s49 = sphi 0, %s33
      %s53 = sphi 0, %s53
      %s55 = sphi 0, %s53
      %s56 = sphi 0, %s55
      %s70 = sphi 0, %s56
      %s74 = sphi 0, %s74
      %s76 = sphi 0, %s74
      %s77 = sphi 0, %s76
      %s91 = sphi 0, %s77
      %s95 = sphi 0, %s95
      %s97 = sphi 0, %s95
      %s98 = sphi 0, %s97
      %s112 = sphi 0, %s98
      %s116 = sphi 0, %s116
      %s118 = sphi 0, %s116
      %s119 = sphi 0, %s118
      %s133 = sphi 0, %s119
      %s137 = sphi 0, %s137
      %s139 = sphi 0, %s137
      %s140 = sphi 0, %s139
      %s154 = sphi 0, %s140
      %s158 = sphi 0, %s158
      %s160 = sphi 0, %s158
      %s161 = sphi 0, %s160
      %s175 = sphi 0, %s161
      %s181 = sphi 0, %s183
      %s184 = sphi 0, %s181
      %s185 = sphi 0, %s184
      %s201 = sphi 0, %s185
    $region4: #{tpu_custom_call.1} parent=1 // loop_header_branch
      %22 = sbr.rel (%p20) target = $region8
    $region5: #{tpu_custom_call.1} parent=1 // loop_body
      %s24 = ssub.s32 %s19, 1
      %s25 = ssub.s32 %s19, 2
      %s26 = sadd.s32 %s19, 1
      %s27 = ssub.s32 %s19, %s26
      %p28 = scmp.eq.s32.totalorder %s27, 0
      %s30 = sadd.s32 %s29, 1
      %s31 = scalar_select %p28, %s29, %s30
      %p34 = pneg %p28
      %p35 = scmp.eq.s32.totalorder %s19, 1
      %p36 = por %p34, %p35
      %p37 = scmp.ne.s32.totalorder %s29, %s32
      %p38 = scmp.eq.s32.totalorder %s19, 0
      %p39 = por %p37, %p38
      %p40 = scmp.ne.s32.totalorder %s29, %s32
      %p41 = scmp.eq.s32.totalorder %s24, 1
      %p42 = por %p40, %p41
      %p43 = scmp.ne.s32.totalorder %s32, %s33
      %p44 = scmp.eq.s32.totalorder %s24, 0
      %p45 = por %p43, %p44
      %p46 = scmp.ne.s32.totalorder %s32, %s33
      %p47 = scmp.eq.s32.totalorder %s25, 1
      %p48 = por %p46, %p47
      %p50 = scmp.ne.s32.totalorder %s33, %s49
      %p51 = scmp.eq.s32.totalorder %s25, 0
      %p52 = por %p50, %p51
      %s54 = sadd.s32 %s53, 1
      %p57 = scmp.eq.s32.totalorder %s19, 1
      %p58 = scmp.ne.s32.totalorder %s53, %s55
      %p59 = scmp.eq.s32.totalorder %s19, 0
      %p60 = por %p58, %p59
      %p61 = scmp.ne.s32.totalorder %s53, %s55
      %p62 = scmp.eq.s32.totalorder %s24, 1
      %p63 = por %p61, %p62
      %p64 = scmp.ne.s32.totalorder %s55, %s56
      %p65 = scmp.eq.s32.totalorder %s24, 0
      %p66 = por %p64, %p65
      %p67 = scmp.ne.s32.totalorder %s55, %s56
      %p68 = scmp.eq.s32.totalorder %s25, 1
      %p69 = por %p67, %p68
      %p71 = scmp.ne.s32.totalorder %s56, %s70
      %p72 = scmp.eq.s32.totalorder %s25, 0
      %p73 = por %p71, %p72
      %s75 = sadd.s32 %s74, 1
      %p78 = scmp.eq.s32.totalorder %s19, 1
      %p79 = scmp.ne.s32.totalorder %s74, %s76
      %p80 = scmp.eq.s32.totalorder %s19, 0
      %p81 = por %p79, %p80
      %p82 = scmp.ne.s32.totalorder %s74, %s76
      %p83 = scmp.eq.s32.totalorder %s24, 1
      %p84 = por %p82, %p83
      %p85 = scmp.ne.s32.totalorder %s76, %s77
      %p86 = scmp.eq.s32.totalorder %s24, 0
      %p87 = por %p85, %p86
      %p88 = scmp.ne.s32.totalorder %s76, %s77
      %p89 = scmp.eq.s32.totalorder %s25, 1
      %p90 = por %p88, %p89
      %p92 = scmp.ne.s32.totalorder %s77, %s91
      %p93 = scmp.eq.s32.totalorder %s25, 0
      %p94 = por %p92, %p93
      %s96 = sadd.s32 %s95, 1
      %p99 = scmp.eq.s32.totalorder %s19, 1
      %p100 = scmp.ne.s32.totalorder %s95, %s97
      %p101 = scmp.eq.s32.totalorder %s19, 0
      %p102 = por %p100, %p101
      %p103 = scmp.ne.s32.totalorder %s95, %s97
      %p104 = scmp.eq.s32.totalorder %s24, 1
      %p105 = por %p103, %p104
      %p106 = scmp.ne.s32.totalorder %s97, %s98
      %p107 = scmp.eq.s32.totalorder %s24, 0
      %p108 = por %p106, %p107
      %p109 = scmp.ne.s32.totalorder %s97, %s98
      %p110 = scmp.eq.s32.totalorder %s25, 1
      %p111 = por %p109, %p110
      %p113 = scmp.ne.s32.totalorder %s98, %s112
      %p114 = scmp.eq.s32.totalorder %s25, 0
      %p115 = por %p113, %p114
      %s117 = sadd.s32 %s116, 1
      %p120 = scmp.eq.s32.totalorder %s19, 1
      %p121 = scmp.ne.s32.totalorder %s116, %s118
      %p122 = scmp.eq.s32.totalorder %s19, 0
      %p123 = por %p121, %p122
      %p124 = scmp.ne.s32.totalorder %s116, %s118
      %p125 = scmp.eq.s32.totalorder %s24, 1
      %p126 = por %p124, %p125
      %p127 = scmp.ne.s32.totalorder %s118, %s119
      %p128 = scmp.eq.s32.totalorder %s24, 0
      %p129 = por %p127, %p128
      %p130 = scmp.ne.s32.totalorder %s118, %s119
      %p131 = scmp.eq.s32.totalorder %s25, 1
      %p132 = por %p130, %p131
      %p134 = scmp.ne.s32.totalorder %s119, %s133
      %p135 = scmp.eq.s32.totalorder %s25, 0
      %p136 = por %p134, %p135
      %s138 = sadd.s32 %s137, 1
      %p141 = scmp.eq.s32.totalorder %s19, 1
      %p142 = scmp.ne.s32.totalorder %s137, %s139
      %p143 = scmp.eq.s32.totalorder %s19, 0
      %p144 = por %p142, %p143
      %p145 = scmp.ne.s32.totalorder %s137, %s139
      %p146 = scmp.eq.s32.totalorder %s24, 1
      %p147 = por %p145, %p146
      %p148 = scmp.ne.s32.totalorder %s139, %s140
      %p149 = scmp.eq.s32.totalorder %s24, 0
      %p150 = por %p148, %p149
      %p151 = scmp.ne.s32.totalorder %s139, %s140
      %p152 = scmp.eq.s32.totalorder %s25, 1
      %p153 = por %p151, %p152
      %p155 = scmp.ne.s32.totalorder %s140, %s154
      %p156 = scmp.eq.s32.totalorder %s25, 0
      %p157 = por %p155, %p156
      %s159 = sadd.s32 %s158, 1
      %p162 = scmp.eq.s32.totalorder %s19, 1
      %p163 = scmp.ne.s32.totalorder %s158, %s160
      %p164 = scmp.eq.s32.totalorder %s19, 0
      %p165 = por %p163, %p164
      %p166 = scmp.ne.s32.totalorder %s158, %s160
      %p167 = scmp.eq.s32.totalorder %s24, 1
      %p168 = por %p166, %p167
      %p169 = scmp.ne.s32.totalorder %s160, %s161
      %p170 = scmp.eq.s32.totalorder %s24, 0
      %p171 = por %p169, %p170
      %p172 = scmp.ne.s32.totalorder %s160, %s161
      %p173 = scmp.eq.s32.totalorder %s25, 1
      %p174 = por %p172, %p173
      %p176 = scmp.ne.s32.totalorder %s161, %s175
      %p177 = scmp.eq.s32.totalorder %s25, 0
      %p178 = por %p176, %p177
      %s179 = ssub.s32 %s19, %s26
      %p180 = scmp.eq.s32.totalorder %s179, 0
      %s182 = sadd.s32 %s181, 1
      %s183 = scalar_select %p180, %s181, %s182
      %p186 = pneg %p180
      %p187 = scmp.eq.s32.totalorder %s19, 1
      %p188 = por %p186, %p187
      %p189 = scmp.ne.s32.totalorder %s181, %s184
      %p190 = scmp.eq.s32.totalorder %s19, 0
      %p191 = por %p189, %p190
      %p192 = scmp.ne.s32.totalorder %s181, %s184
      %p193 = scmp.eq.s32.totalorder %s24, 1
      %p194 = por %p192, %p193
      %p195 = scmp.ne.s32.totalorder %s184, %s185
      %p196 = scmp.eq.s32.totalorder %s24, 0
      %p197 = por %p195, %p196
      %p198 = scmp.ne.s32.totalorder %s184, %s185
      %p199 = scmp.eq.s32.totalorder %s25, 1
      %p200 = por %p198, %p199
      %p202 = scmp.ne.s32.totalorder %s185, %s201
      %p203 = scmp.eq.s32.totalorder %s25, 0
      %p204 = por %p202, %p203
      %p205 = scmp.le.s32.totalorder 1, %s19
      %p206 = scmp.lt.s32.totalorder %s19, 3
      %p207 = pnand %p205, %p206
      %p208 = pneg %p207
      // Predicated region
      $region9: #{tpu_custom_call.1} parent=5 // pred_check
        _
      $region10: #{tpu_custom_call.1} parent=5 // pred_check_branch
        %210 = sbr.rel (%p207) target = $region12
      $region11: #{tpu_custom_call.1} parent=5 // pred_region
        %s211 = ssub.s32 %s19, 1
        // Predicated region
        $region13: #{tpu_custom_call.1} parent=11 // pred_check
          %p212 = pneg %p66
        $region14: #{tpu_custom_call.1} parent=11 // pred_check_branch
          %214 = sbr.rel (%p212) target = $region16
        $region15: #{tpu_custom_call.1} parent=11 // pred_region
          _
        $region16: #{tpu_custom_call.1} parent=11 // pred_fallthru
          _
        // Predicated region
        $region17: #{tpu_custom_call.1} parent=11 // pred_check
          %p215 = pneg %p87
        $region18: #{tpu_custom_call.1} parent=11 // pred_check_branch
          %217 = sbr.rel (%p215) target = $region20
        $region19: #{tpu_custom_call.1} parent=11 // pred_region
          _
        $region20: #{tpu_custom_call.1} parent=11 // pred_fallthru
          _
        // Predicated region
        $region21: #{tpu_custom_call.1} parent=11 // pred_check
          %p218 = pneg %p108
        $region22: #{tpu_custom_call.1} parent=11 // pred_check_branch
          %220 = sbr.rel (%p218) target = $region24
        $region23: #{tpu_custom_call.1} parent=11 // pred_region
          _
        $region24: #{tpu_custom_call.1} parent=11 // pred_fallthru
          _
        // Predicated region
        $region25: #{tpu_custom_call.1} parent=11 // pred_check
          %p221 = pneg %p129
        $region26: #{tpu_custom_call.1} parent=11 // pred_check_branch
          %223 = sbr.rel (%p221) target = $region28
        $region27: #{tpu_custom_call.1} parent=11 // pred_region
          _
        $region28: #{tpu_custom_call.1} parent=11 // pred_fallthru
          _
        // Predicated region
        $region29: #{tpu_custom_call.1} parent=11 // pred_check
          %p224 = pneg %p150
        $region30: #{tpu_custom_call.1} parent=11 // pred_check_branch
          %226 = sbr.rel (%p224) target = $region32
        $region31: #{tpu_custom_call.1} parent=11 // pred_region
          _
        $region32: #{tpu_custom_call.1} parent=11 // pred_fallthru
          _
        // Predicated region
        $region33: #{tpu_custom_call.1} parent=11 // pred_check
          %p227 = pneg %p171
        $region34: #{tpu_custom_call.1} parent=11 // pred_check_branch
          %229 = sbr.rel (%p227) target = $region36
        $region35: #{tpu_custom_call.1} parent=11 // pred_region
          _
        $region36: #{tpu_custom_call.1} parent=11 // pred_fallthru
          _
      $region12: #{tpu_custom_call.1} parent=5 // pred_fallthru
        _
      %p230 = scmp.lt.s32.totalorder %s19, 2
      // Predicated region
      $region37: #{tpu_custom_call.1} parent=5 // pred_check
        %p231 = pneg %p230
      $region38: #{tpu_custom_call.1} parent=5 // pred_check_branch
        %233 = sbr.rel (%p231) target = $region40
      $region39: #{tpu_custom_call.1} parent=5 // pred_region
        // Predicated region
        $region41: #{tpu_custom_call.1} parent=39 // pred_check
          %p234 = pneg %p39
        $region42: #{tpu_custom_call.1} parent=39 // pred_check_branch
          %236 = sbr.rel (%p234) target = $region44
        $region43: #{tpu_custom_call.1} parent=39 // pred_region
          %s237 = sand.u32 %s29, 1
          %s238 = scalar_lea.sflag [#allocation4], %s237
          %s239 = sand.u32 %s29, 1
          %s240 = smul.addr %s239, 64
          %s241 = scalar_lea.vmem [#allocation3], %s240
          %s243 = ssub.s32 1024, 1024
          %244 = vsyncadd %s238, %s243
          %s245 = smul.addr %s19, 8
          %s246 = smul.addr %s245, 128
          %s247 = scalar_lea.hbm %s0, %s246
          %s248 = sshll.u32 %s241, 4
          %s249 = int_to_ptr.vmem [resolvable:$true] %s248
          %254 = dma.hbm_to_vmem [thread:$0]  %s247, 1024, %s249, %s238, 128, 128, 8
        $region44: #{tpu_custom_call.1} parent=39 // pred_fallthru
          _
      $region40: #{tpu_custom_call.1} parent=5 // pred_fallthru
        _
      %p255 = scmp.le.s32.totalorder 1, %s19
      %p256 = scmp.lt.s32.totalorder %s19, 3
      %p257 = pnand %p255, %p256
      %p258 = pneg %p257
      // Predicated region
      $region45: #{tpu_custom_call.1} parent=5 // pred_check
        _
      $region46: #{tpu_custom_call.1} parent=5 // pred_check_branch
        %260 = sbr.rel (%p257) target = $region48
      $region47: #{tpu_custom_call.1} parent=5 // pred_region
        %s261 = ssub.s32 %s19, 1
        %s262 = sand.u32 %s32, 1
        %s263 = scalar_lea.sflag [#allocation4], %s262
        %s264 = sand.u32 %s32, 1
        %s265 = smul.addr %s264, 64
        %s266 = scalar_lea.vmem [#allocation3], %s265
        // Predicated region
        $region49: #{tpu_custom_call.1} parent=47 // pred_check
          %p267 = pneg %p45
        $region50: #{tpu_custom_call.1} parent=47 // pred_check_branch
          %269 = sbr.rel (%p267) target = $region52
        $region51: #{tpu_custom_call.1} parent=47 // pred_region
          %270 = dma.done %s263, 1024
        $region52: #{tpu_custom_call.1} parent=47 // pred_fallthru
          _
        %s271 = sand.u32 %s32, 1
        %s272 = scalar_lea.sflag [#allocation4], %s271
        %s273 = sand.u32 %s32, 1
        %s274 = smul.addr %s273, 64
        %s275 = scalar_lea.vmem [#allocation3], %s274
        %p276 = pneg %p45
        %p277 = pneg %p42
        %p278 = pneg %p66
        %p279 = pneg %p63
        %p280 = pneg %p87
        %p281 = pneg %p84
        %p282 = pneg %p108
        %p283 = pneg %p105
        %p284 = pneg %p129
        %p285 = pneg %p126
        %p286 = pneg %p150
        %p287 = pneg %p147
        %p288 = pneg %p171
        %p289 = pneg %p168
        %p290 = pneg %p197
        %p291 = pneg %p194
        %s292 = sand.u32 %s184, 1
        %s293 = scalar_lea.sflag [#allocation5], %s292
        %s294 = sand.u32 %s184, 1
        %s295 = smul.addr %s294, 64
        %s296 = scalar_lea.vmem [#allocation6], %s295
        %v297 = vld [vmem:[%s266] sm:$0xff]
        %v298 = vld [vmem:[%s266 + $0x8] sm:$0xff]
        %v299 = vld [vmem:[%s266 + $0x10] sm:$0xff]
        %v300 = vld [vmem:[%s266 + $0x18] sm:$0xff]
        %v301 = vld [vmem:[%s266 + $0x20] sm:$0xff]
        %v302 = vld [vmem:[%s266 + $0x28] sm:$0xff]
        %v303 = vld [vmem:[%s266 + $0x30] sm:$0xff]
        %v304 = vld [vmem:[%s266 + $0x38] sm:$0xff]
        %v305 = vld [vmem:[%s1] sm:$0xff]
        %v306 = vld [vmem:[%s2] sm:$0x1]
        %v308 = vlaneseq
        %v309 = vshrl.u32 %v308, 7
        %v310 = vsub.s32 0, %v309
        %v311 = vrot.slane %v306, %v310
        %vm313 = vcmask 64512
        %v315 = vsel %vm313, %v297, 0
        %v318 = vsel %vm313, %v298, 0
        %v321 = vsel %vm313, %v299, 0
        %v324 = vsel %vm313, %v300, 0
        %v327 = vsel %vm313, %v301, 0
        %v330 = vsel %vm313, %v302, 0
        %v333 = vsel %vm313, %v303, 0
        %v336 = vsel %vm313, %v304, 0
        %338 = vmatprep.subr.mxu0 0.0
        %339 = vmatpush1.msra.mxu0 %v305
        %340 = vmatprep.subr.mxu0 0.0
        %341 = vmatpush1.msra.mxu0 0.0
        %342 = vmatprep.subr.mxu0 0.0
        %343 = vmatpush1.msra.mxu0 0.0
        %344 = vmatprep.subr.mxu0 0.0
        %345 = vmatpush1.msra.mxu0 0.0
        %346 = vmatprep.subr.mxu0 0.0
        %347 = vmatpush1.msra.mxu0 0.0
        %348 = vmatprep.subr.mxu0 0.0
        %349 = vmatpush1.msra.mxu0 0.0
        %350 = vmatprep.subr.mxu0 0.0
        %351 = vmatpush1.msra.mxu0 0.0
        %352 = vmatprep.subr.mxu0 0.0
        %353 = vmatpush1.msra.mxu0 0.0
        %354 = vmatprep.subr.mxu0 0.0
        %355 = vmatpush1.msra.mxu0 0.0
        %356 = vmatprep.subr.mxu0 0.0
        %357 = vmatpush1.msra.mxu0 0.0
        %358 = vmatprep.subr.mxu0 0.0
        %359 = vmatpush1.msra.mxu0 0.0
        %360 = vmatprep.subr.mxu0 0.0
        %361 = vmatpush1.msra.mxu0 0.0
        %362 = vmatprep.subr.mxu0 0.0
        %363 = vmatpush1.msra.mxu0 0.0
        %364 = vmatprep.subr.mxu0 0.0
        %365 = vmatpush1.msra.mxu0 0.0
        %366 = vmatprep.subr.mxu0 0.0
        %367 = vmatpush1.msra.mxu0 0.0
        %368 = vmatprep.subr.mxu0 0.0
        %369 = vmatpush1.msra.mxu0 0.0
        %370 = vmatprep.subr.mxu0 0.0
        %371 = vmatpush1.msra.mxu0 0.0
        %372 = vmatprep.subr.mxu0 0.0
        %373 = vmatpush1.msra.mxu0 0.0
        %374 = vmatprep.subr.mxu0 0.0
        %375 = vmatpush1.msra.mxu0 0.0
        %376 = vmatprep.subr.mxu0 0.0
        %377 = vmatpush1.msra.mxu0 0.0
        %378 = vmatprep.subr.mxu0 0.0
        %379 = vmatpush1.msra.mxu0 0.0
        %380 = vmatprep.subr.mxu0 0.0
        %381 = vmatpush1.msra.mxu0 0.0
        %382 = vmatprep.subr.mxu0 0.0
        %383 = vmatpush1.msra.mxu0 0.0
        %384 = vmatprep.subr.mxu0 0.0
        %385 = vmatpush1.msra.mxu0 0.0
        %386 = vmatprep.subr.mxu0 0.0
        %387 = vmatpush1.msra.mxu0 0.0
        %388 = vmatprep.subr.mxu0 0.0
        %389 = vmatpush1.msra.mxu0 0.0
        %390 = vmatprep.subr.mxu0 0.0
        %391 = vmatpush1.msra.mxu0 0.0
        %392 = vmatprep.subr.mxu0 0.0
        %393 = vmatpush1.msra.mxu0 0.0
        %394 = vmatprep.subr.mxu0 0.0
        %395 = vmatpush1.msra.mxu0 0.0
        %396 = vmatprep.subr.mxu0 0.0
        %397 = vmatpush1.msra.mxu0 0.0
        %398 = vmatprep.subr.mxu0 0.0
        %399 = vmatpush1.msra.mxu0 0.0
        %400 = vmatprep.subr.mxu0 0.0
        %401 = vmatpush1.msra.mxu0 0.0
        %402 = vmatprep.mubr.f32.mxu0 0.0
        %403 = vmatmul.mubr.f32.gmra.mrb[0].mxu0 %v315
        %v404 = vpop.f32.mrb[0].mxu0
        %v405 = vadd.f32 %v311, %v404
        %v406 = vpop.f32.mrb[0].mxu0
        %407 = vmatprep.mubr.f32.mxu0 0.0
        %408 = vmatmul.mubr.f32.gmra.mrb[0].mxu0 %v318
        %v409 = vpop.f32.mrb[0].mxu0
        %v410 = vadd.f32 %v311, %v409
        %v411 = vpop.f32.mrb[0].mxu0
        %412 = vmatprep.mubr.f32.mxu0 0.0
        %413 = vmatmul.mubr.f32.gmra.mrb[0].mxu0 %v321
        %v414 = vpop.f32.mrb[0].mxu0
        %v415 = vadd.f32 %v311, %v414
        %v416 = vpop.f32.mrb[0].mxu0
        %417 = vmatprep.mubr.f32.mxu0 0.0
        %418 = vmatmul.mubr.f32.gmra.mrb[0].mxu0 %v324
        %v419 = vpop.f32.mrb[0].mxu0
        %v420 = vadd.f32 %v311, %v419
        %v421 = vpop.f32.mrb[0].mxu0
        %422 = vmatprep.mubr.f32.mxu0 0.0
        %423 = vmatmul.mubr.f32.gmra.mrb[0].mxu0 %v327
        %v424 = vpop.f32.mrb[0].mxu0
        %v425 = vadd.f32 %v311, %v424
        %v426 = vpop.f32.mrb[0].mxu0
        %427 = vmatprep.mubr.f32.mxu0 0.0
        %428 = vmatmul.mubr.f32.gmra.mrb[0].mxu0 %v330
        %v429 = vpop.f32.mrb[0].mxu0
        %v430 = vadd.f32 %v311, %v429
        %v431 = vpop.f32.mrb[0].mxu0
        %432 = vmatprep.mubr.f32.mxu0 0.0
        %433 = vmatmul.mubr.f32.gmra.mrb[0].mxu0 %v333
        %v434 = vpop.f32.mrb[0].mxu0
        %v435 = vadd.f32 %v311, %v434
        %v436 = vpop.f32.mrb[0].mxu0
        %437 = vmatprep.mubr.f32.mxu0 0.0
        %438 = vmatmul.mubr.f32.gmra.mrb[0].mxu0 %v336
        %v439 = vpop.f32.mrb[0].mxu0
        %v440 = vadd.f32 %v311, %v439
        %v441 = vpop.f32.mrb[0].mxu0
        %442 = vdwg.mxu0
        %v443 = vmax.f32 %v405, 0.0
        %v444 = vmax.f32 %v410, 0.0
        %v445 = vmax.f32 %v415, 0.0
        %v446 = vmax.f32 %v420, 0.0
        %v447 = vmax.f32 %v425, 0.0
        %v448 = vmax.f32 %v430, 0.0
        %v449 = vmax.f32 %v435, 0.0
        %v450 = vmax.f32 %v440, 0.0
        %v451 = vmin.f32 %v443, 6.0
        %v452 = vmin.f32 %v444, 6.0
        %v453 = vmin.f32 %v445, 6.0
        %v454 = vmin.f32 %v446, 6.0
        %v455 = vmin.f32 %v447, 6.0
        %v456 = vmin.f32 %v448, 6.0
        %v457 = vmin.f32 %v449, 6.0
        %v458 = vmin.f32 %v450, 6.0
        %vm459 = vcmask 130048
        %460 = vst.msk [vmem:[#allocation2] sm:$0xff] %vm459, 0.0
        %vm461 = vcmask 123904
        %462 = vst.msk [vmem:[#allocation2 + $0x8] sm:$0x3] %vm461, 0.0
        %463 = vst.msk [vmem:[#allocation2 + $0x10] sm:$0xff] %vm459, 0.0
        %464 = vst.msk [vmem:[#allocation2 + $0x18] sm:$0x3] %vm461, 0.0
        %465 = vst.msk [vmem:[#allocation2 + $0x20] sm:$0xff] %vm459, 0.0
        %466 = vst.msk [vmem:[#allocation2 + $0x28] sm:$0x3] %vm461, 0.0
        %467 = vst.msk [vmem:[#allocation2 + $0x30] sm:$0xff] %vm459, 0.0
        %468 = vst.msk [vmem:[#allocation2 + $0x38] sm:$0x3] %vm461, 0.0
        %469 = vst.msk [vmem:[#allocation2 + $0x40] sm:$0xff] %vm459, 0.0
        %470 = vst.msk [vmem:[#allocation2 + $0x48] sm:$0x3] %vm461, 0.0
        %471 = vst.msk [vmem:[#allocation2 + $0x50] sm:$0xff] %vm459, 0.0
        %472 = vst.msk [vmem:[#allocation2 + $0x58] sm:$0x3] %vm461, 0.0
        %473 = vst.msk [vmem:[#allocation2 + $0x60] sm:$0xff] %vm459, 0.0
        %474 = vst.msk [vmem:[#allocation2 + $0x68] sm:$0x3] %vm461, 0.0
        %475 = vst.msk [vmem:[#allocation2 + $0x70] sm:$0xff] %vm459, 0.0
        %476 = vst.msk [vmem:[#allocation2 + $0x78] sm:$0x3] %vm461, 0.0
        %477 = vst.msk [vmem:[#allocation2 + $0x80] sm:$0xff] %vm459, 0.0
        %478 = vst.msk [vmem:[#allocation2 + $0x88] sm:$0x3] %vm461, 0.0
        %479 = vst.msk [vmem:[#allocation2 + $0x90] sm:$0xff] %vm459, 0.0
        %480 = vst.msk [vmem:[#allocation2 + $0x98] sm:$0x3] %vm461, 0.0
        %s481 = scalar_lea.vmem [#allocation2], 16
        %482 = vst.msk [vmem:[%s481 + $0x1] sm:$0xff] %vm459, %v451
        %483 = vst.msk [vmem:[%s481 + $0x11] sm:$0xff] %vm459, %v452
        %484 = vst.msk [vmem:[%s481 + $0x21] sm:$0xff] %vm459, %v453
        %485 = vst.msk [vmem:[%s481 + $0x31] sm:$0xff] %vm459, %v454
        %486 = vst.msk [vmem:[%s481 + $0x41] sm:$0xff] %vm459, %v455
        %487 = vst.msk [vmem:[%s481 + $0x51] sm:$0xff] %vm459, %v456
        %488 = vst.msk [vmem:[%s481 + $0x61] sm:$0xff] %vm459, %v457
        %489 = vst.msk [vmem:[%s481 + $0x71] sm:$0xff] %vm459, %v458
        %v490 = vld [vmem:[%s3] sm:$0x7]
        %v491 = vld [vmem:[%s3 + $0x4] sm:$0x7]
        %v492 = vld [vmem:[%s3 + $0x8] sm:$0x7]
        %v493 = vld [vmem:[#allocation2] sm:$0xff]
        %v494 = vld [vmem:[#allocation2 + $0x10] sm:$0xff]
        %v495 = vld [vmem:[#allocation2 + $0x20] sm:$0xff]
        %v496 = vld [vmem:[#allocation2 + $0x30] sm:$0xff]
        %v497 = vld [vmem:[#allocation2 + $0x40] sm:$0xff]
        %v498 = vld [vmem:[#allocation2 + $0x50] sm:$0xff]
        %v499 = vld [vmem:[#allocation2 + $0x60] sm:$0xff]
        %v500 = vld [vmem:[#allocation2 + $0x70] sm:$0xff]
        %v501 = vlaneseq
        %v502 = vshrl.u32 %v501, 7
        %v503 = vsub.s32 0, %v502
        %v504 = vrot.slane %v490, %v503
        %v505 = vmul.f32 %v493, %v504
        %v506 = vmul.f32 %v494, %v504
        %v507 = vmul.f32 %v495, %v504
        %v508 = vmul.f32 %v496, %v504
        %v509 = vmul.f32 %v497, %v504
        %v510 = vmul.f32 %v498, %v504
        %v511 = vmul.f32 %v499, %v504
        %v512 = vmul.f32 %v500, %v504
        %v513 = vadd.f32 %v505, 0.0
        %v514 = vadd.f32 %v506, 0.0
        %v515 = vadd.f32 %v507, 0.0
        %v516 = vadd.f32 %v508, 0.0
        %v517 = vadd.f32 %v509, 0.0
        %v518 = vadd.f32 %v510, 0.0
        %v519 = vadd.f32 %v511, 0.0
        %v520 = vadd.f32 %v512, 0.0
        %v521 = vld [vmem:[#allocation2 + $0x1] sm:$0xff]
        %v522 = vld [vmem:[#allocation2 + $0x11] sm:$0xff]
        %v523 = vld [vmem:[#allocation2 + $0x21] sm:$0xff]
        %v524 = vld [vmem:[#allocation2 + $0x31] sm:$0xff]
        %v525 = vld [vmem:[#allocation2 + $0x41] sm:$0xff]
        %v526 = vld [vmem:[#allocation2 + $0x51] sm:$0xff]
        %v527 = vld [vmem:[#allocation2 + $0x61] sm:$0xff]
        %v528 = vld [vmem:[#allocation2 + $0x71] sm:$0xff]
        %v529 = vlaneseq
        %v530 = vshrl.u32 %v529, 7
        %v531 = vsub.s32 1, %v530
        %v532 = vrot.slane %v490, %v531
        %v533 = vmul.f32 %v521, %v532
        %v534 = vmul.f32 %v522, %v532
        %v535 = vmul.f32 %v523, %v532
        %v536 = vmul.f32 %v524, %v532
        %v537 = vmul.f32 %v525, %v532
        %v538 = vmul.f32 %v526, %v532
        %v539 = vmul.f32 %v527, %v532
        %v540 = vmul.f32 %v528, %v532
        %v541 = vadd.f32 %v513, %v533
        %v542 = vadd.f32 %v514, %v534
        %v543 = vadd.f32 %v515, %v535
        %v544 = vadd.f32 %v516, %v536
        %v545 = vadd.f32 %v517, %v537
        %v546 = vadd.f32 %v518, %v538
        %v547 = vadd.f32 %v519, %v539
        %v548 = vadd.f32 %v520, %v540
        %v549 = vld [vmem:[#allocation2 + $0x2] sm:$0xff]
        %v550 = vld [vmem:[#allocation2 + $0x12] sm:$0xff]
        %v551 = vld [vmem:[#allocation2 + $0x22] sm:$0xff]
        %v552 = vld [vmem:[#allocation2 + $0x32] sm:$0xff]
        %v553 = vld [vmem:[#allocation2 + $0x42] sm:$0xff]
        %v554 = vld [vmem:[#allocation2 + $0x52] sm:$0xff]
        %v555 = vld [vmem:[#allocation2 + $0x62] sm:$0xff]
        %v556 = vld [vmem:[#allocation2 + $0x72] sm:$0xff]
        %v557 = vlaneseq
        %v558 = vshrl.u32 %v557, 7
        %v559 = vsub.s32 2, %v558
        %v560 = vrot.slane %v490, %v559
        %v561 = vmul.f32 %v549, %v560
        %v562 = vmul.f32 %v550, %v560
        %v563 = vmul.f32 %v551, %v560
        %v564 = vmul.f32 %v552, %v560
        %v565 = vmul.f32 %v553, %v560
        %v566 = vmul.f32 %v554, %v560
        %v567 = vmul.f32 %v555, %v560
        %v568 = vmul.f32 %v556, %v560
        %v569 = vadd.f32 %v541, %v561
        %v570 = vadd.f32 %v542, %v562
        %v571 = vadd.f32 %v543, %v563
        %v572 = vadd.f32 %v544, %v564
        %v573 = vadd.f32 %v545, %v565
        %v574 = vadd.f32 %v546, %v566
        %v575 = vadd.f32 %v547, %v567
        %v576 = vadd.f32 %v548, %v568
        %v577 = vld [vmem:[%s481] sm:$0xff]
        %v578 = vld [vmem:[%s481 + $0x10] sm:$0xff]
        %v579 = vld [vmem:[%s481 + $0x20] sm:$0xff]
        %v580 = vld [vmem:[%s481 + $0x30] sm:$0xff]
        %v581 = vld [vmem:[%s481 + $0x40] sm:$0xff]
        %v582 = vld [vmem:[%s481 + $0x50] sm:$0xff]
        %v583 = vld [vmem:[%s481 + $0x60] sm:$0xff]
        %v584 = vld [vmem:[%s481 + $0x70] sm:$0xff]
        %v585 = vlaneseq
        %v586 = vshrl.u32 %v585, 7
        %v587 = vsub.s32 0, %v586
        %v588 = vrot.slane %v491, %v587
        %v589 = vmul.f32 %v577, %v588
        %v590 = vmul.f32 %v578, %v588
        %v591 = vmul.f32 %v579, %v588
        %v592 = vmul.f32 %v580, %v588
        %v593 = vmul.f32 %v581, %v588
        %v594 = vmul.f32 %v582, %v588
        %v595 = vmul.f32 %v583, %v588
        %v596 = vmul.f32 %v584, %v588
        %v597 = vadd.f32 %v569, %v589
        %v598 = vadd.f32 %v570, %v590
        %v599 = vadd.f32 %v571, %v591
        %v600 = vadd.f32 %v572, %v592
        %v601 = vadd.f32 %v573, %v593
        %v602 = vadd.f32 %v574, %v594
        %v603 = vadd.f32 %v575, %v595
        %v604 = vadd.f32 %v576, %v596
        %v605 = vld [vmem:[%s481 + $0x1] sm:$0xff]
        %v606 = vld [vmem:[%s481 + $0x11] sm:$0xff]
        %v607 = vld [vmem:[%s481 + $0x21] sm:$0xff]
        %v608 = vld [vmem:[%s481 + $0x31] sm:$0xff]
        %v609 = vld [vmem:[%s481 + $0x41] sm:$0xff]
        %v610 = vld [vmem:[%s481 + $0x51] sm:$0xff]
        %v611 = vld [vmem:[%s481 + $0x61] sm:$0xff]
        %v612 = vld [vmem:[%s481 + $0x71] sm:$0xff]
        %v613 = vlaneseq
        %v614 = vshrl.u32 %v613, 7
        %v615 = vsub.s32 1, %v614
        %v616 = vrot.slane %v491, %v615
        %v617 = vmul.f32 %v605, %v616
        %v618 = vmul.f32 %v606, %v616
        %v619 = vmul.f32 %v607, %v616
        %v620 = vmul.f32 %v608, %v616
        %v621 = vmul.f32 %v609, %v616
        %v622 = vmul.f32 %v610, %v616
        %v623 = vmul.f32 %v611, %v616
        %v624 = vmul.f32 %v612, %v616
        %v625 = vadd.f32 %v597, %v617
        %v626 = vadd.f32 %v598, %v618
        %v627 = vadd.f32 %v599, %v619
        %v628 = vadd.f32 %v600, %v620
        %v629 = vadd.f32 %v601, %v621
        %v630 = vadd.f32 %v602, %v622
        %v631 = vadd.f32 %v603, %v623
        %v632 = vadd.f32 %v604, %v624
        %v633 = vld [vmem:[%s481 + $0x2] sm:$0xff]
        %v634 = vld [vmem:[%s481 + $0x12] sm:$0xff]
        %v635 = vld [vmem:[%s481 + $0x22] sm:$0xff]
        %v636 = vld [vmem:[%s481 + $0x32] sm:$0xff]
        %v637 = vld [vmem:[%s481 + $0x42] sm:$0xff]
        %v638 = vld [vmem:[%s481 + $0x52] sm:$0xff]
        %v639 = vld [vmem:[%s481 + $0x62] sm:$0xff]
        %v640 = vld [vmem:[%s481 + $0x72] sm:$0xff]
        %v641 = vlaneseq
        %v642 = vshrl.u32 %v641, 7
        %v643 = vsub.s32 2, %v642
        %v644 = vrot.slane %v491, %v643
        %v645 = vmul.f32 %v633, %v644
        %v646 = vmul.f32 %v634, %v644
        %v647 = vmul.f32 %v635, %v644
        %v648 = vmul.f32 %v636, %v644
        %v649 = vmul.f32 %v637, %v644
        %v650 = vmul.f32 %v638, %v644
        %v651 = vmul.f32 %v639, %v644
        %v652 = vmul.f32 %v640, %v644
        %v653 = vadd.f32 %v625, %v645
        %v654 = vadd.f32 %v626, %v646
        %v655 = vadd.f32 %v627, %v647
        %v656 = vadd.f32 %v628, %v648
        %v657 = vadd.f32 %v629, %v649
        %v658 = vadd.f32 %v630, %v650
        %v659 = vadd.f32 %v631, %v651
        %v660 = vadd.f32 %v632, %v652
        %s661 = scalar_lea.vmem [#allocation2], 32
        %v662 = vld [vmem:[%s661] sm:$0xff]
        %v663 = vld [vmem:[%s661 + $0x10] sm:$0xff]
        %v664 = vld [vmem:[%s661 + $0x20] sm:$0xff]
        %v665 = vld [vmem:[%s661 + $0x30] sm:$0xff]
        %v666 = vld [vmem:[%s661 + $0x40] sm:$0xff]
        %v667 = vld [vmem:[%s661 + $0x50] sm:$0xff]
        %v668 = vld [vmem:[%s661 + $0x60] sm:$0xff]
        %v669 = vld [vmem:[%s661 + $0x70] sm:$0xff]
        %v670 = vlaneseq
        %v671 = vshrl.u32 %v670, 7
        %v672 = vsub.s32 0, %v671
        %v673 = vrot.slane %v492, %v672
        %v674 = vmul.f32 %v662, %v673
        %v675 = vmul.f32 %v663, %v673
        %v676 = vmul.f32 %v664, %v673
        %v677 = vmul.f32 %v665, %v673
        %v678 = vmul.f32 %v666, %v673
        %v679 = vmul.f32 %v667, %v673
        %v680 = vmul.f32 %v668, %v673
        %v681 = vmul.f32 %v669, %v673
        %v682 = vadd.f32 %v653, %v674
        %v683 = vadd.f32 %v654, %v675
        %v684 = vadd.f32 %v655, %v676
        %v685 = vadd.f32 %v656, %v677
        %v686 = vadd.f32 %v657, %v678
        %v687 = vadd.f32 %v658, %v679
        %v688 = vadd.f32 %v659, %v680
        %v689 = vadd.f32 %v660, %v681
        %v690 = vld [vmem:[%s661 + $0x1] sm:$0xff]
        %v691 = vld [vmem:[%s661 + $0x11] sm:$0xff]
        %v692 = vld [vmem:[%s661 + $0x21] sm:$0xff]
        %v693 = vld [vmem:[%s661 + $0x31] sm:$0xff]
        %v694 = vld [vmem:[%s661 + $0x41] sm:$0xff]
        %v695 = vld [vmem:[%s661 + $0x51] sm:$0xff]
        %v696 = vld [vmem:[%s661 + $0x61] sm:$0xff]
        %v697 = vld [vmem:[%s661 + $0x71] sm:$0xff]
        %v698 = vlaneseq
        %v699 = vshrl.u32 %v698, 7
        %v700 = vsub.s32 1, %v699
        %v701 = vrot.slane %v492, %v700
        %v702 = vmul.f32 %v690, %v701
        %v703 = vmul.f32 %v691, %v701
        %v704 = vmul.f32 %v692, %v701
        %v705 = vmul.f32 %v693, %v701
        %v706 = vmul.f32 %v694, %v701
        %v707 = vmul.f32 %v695, %v701
        %v708 = vmul.f32 %v696, %v701
        %v709 = vmul.f32 %v697, %v701
        %v710 = vadd.f32 %v682, %v702
        %v711 = vadd.f32 %v683, %v703
        %v712 = vadd.f32 %v684, %v704
        %v713 = vadd.f32 %v685, %v705
        %v714 = vadd.f32 %v686, %v706
        %v715 = vadd.f32 %v687, %v707
        %v716 = vadd.f32 %v688, %v708
        %v717 = vadd.f32 %v689, %v709
        %v718 = vld [vmem:[%s661 + $0x2] sm:$0xff]
        %v719 = vld [vmem:[%s661 + $0x12] sm:$0xff]
        %v720 = vld [vmem:[%s661 + $0x22] sm:$0xff]
        %v721 = vld [vmem:[%s661 + $0x32] sm:$0xff]
        %v722 = vld [vmem:[%s661 + $0x42] sm:$0xff]
        %v723 = vld [vmem:[%s661 + $0x52] sm:$0xff]
        %v724 = vld [vmem:[%s661 + $0x62] sm:$0xff]
        %v725 = vld [vmem:[%s661 + $0x72] sm:$0xff]
        %v726 = vlaneseq
        %v727 = vshrl.u32 %v726, 7
        %v728 = vsub.s32 2, %v727
        %v729 = vrot.slane %v492, %v728
        %v730 = vmul.f32 %v718, %v729
        %v731 = vmul.f32 %v719, %v729
        %v732 = vmul.f32 %v720, %v729
        %v733 = vmul.f32 %v721, %v729
        %v734 = vmul.f32 %v722, %v729
        %v735 = vmul.f32 %v723, %v729
        %v736 = vmul.f32 %v724, %v729
        %v737 = vmul.f32 %v725, %v729
        %v738 = vadd.f32 %v710, %v730
        %v739 = vadd.f32 %v711, %v731
        %v740 = vadd.f32 %v712, %v732
        %v741 = vadd.f32 %v713, %v733
        %v742 = vadd.f32 %v714, %v734
        %v743 = vadd.f32 %v715, %v735
        %v744 = vadd.f32 %v716, %v736
        %v745 = vadd.f32 %v717, %v737
        %v746 = vld [vmem:[%s4] sm:$0x1]
        %v748 = vlaneseq
        %v749 = vshrl.u32 %v748, 7
        %v750 = vsub.s32 0, %v749
        %v751 = vrot.slane %v746, %v750
        %v753 = vadd.f32 %v738, %v751
        %v754 = vadd.f32 %v739, %v751
        %v755 = vadd.f32 %v740, %v751
        %v756 = vadd.f32 %v741, %v751
        %v757 = vadd.f32 %v742, %v751
        %v758 = vadd.f32 %v743, %v751
        %v759 = vadd.f32 %v744, %v751
        %v760 = vadd.f32 %v745, %v751
        %v761 = vmax.f32 %v753, 0.0
        %v762 = vmax.f32 %v754, 0.0
        %v763 = vmax.f32 %v755, 0.0
        %v764 = vmax.f32 %v756, 0.0
        %v765 = vmax.f32 %v757, 0.0
        %v766 = vmax.f32 %v758, 0.0
        %v767 = vmax.f32 %v759, 0.0
        %v768 = vmax.f32 %v760, 0.0
        %v769 = vmin.f32 %v761, 6.0
        %v770 = vmin.f32 %v762, 6.0
        %v771 = vmin.f32 %v763, 6.0
        %v772 = vmin.f32 %v764, 6.0
        %v773 = vmin.f32 %v765, 6.0
        %v774 = vmin.f32 %v766, 6.0
        %v775 = vmin.f32 %v767, 6.0
        %v776 = vmin.f32 %v768, 6.0
        %v777 = vld [vmem:[%s5] sm:$0xff]
        %v778 = vld [vmem:[%s5 + $0x8] sm:$0xff]
        %v779 = vld [vmem:[%s6] sm:$0x1]
        %v781 = vlaneseq
        %v782 = vshrl.u32 %v781, 7
        %v783 = vsub.s32 0, %v782
        %v784 = vrot.slane %v779, %v783
        %v787 = vsel %vm459, %v769, 0
        %v790 = vsel %vm459, %v770, 0
        %v793 = vsel %vm459, %v771, 0
        %v796 = vsel %vm459, %v772, 0
        %v799 = vsel %vm459, %v773, 0
        %v802 = vsel %vm459, %v774, 0
        %v805 = vsel %vm459, %v775, 0
        %v808 = vsel %vm459, %v776, 0
        %810 = vmatprep.subr.mxu0 0.0
        %811 = vmatpush1.msra.mxu0 %v777
        %812 = vmatprep.subr.mxu0 0.0
        %813 = vmatpush1.msra.mxu0 %v778
        %814 = vmatprep.subr.mxu0 0.0
        %815 = vmatpush1.msra.mxu0 0.0
        %816 = vmatprep.subr.mxu0 0.0
        %817 = vmatpush1.msra.mxu0 0.0
        %818 = vmatprep.subr.mxu0 0.0
        %819 = vmatpush1.msra.mxu0 0.0
        %820 = vmatprep.subr.mxu0 0.0
        %821 = vmatpush1.msra.mxu0 0.0
        %822 = vmatprep.subr.mxu0 0.0
        %823 = vmatpush1.msra.mxu0 0.0
        %824 = vmatprep.subr.mxu0 0.0
        %825 = vmatpush1.msra.mxu0 0.0
        %826 = vmatprep.subr.mxu0 0.0
        %827 = vmatpush1.msra.mxu0 0.0
        %828 = vmatprep.subr.mxu0 0.0
        %829 = vmatpush1.msra.mxu0 0.0
        %830 = vmatprep.subr.mxu0 0.0
        %831 = vmatpush1.msra.mxu0 0.0
        %832 = vmatprep.subr.mxu0 0.0
        %833 = vmatpush1.msra.mxu0 0.0
        %834 = vmatprep.subr.mxu0 0.0
        %835 = vmatpush1.msra.mxu0 0.0
        %836 = vmatprep.subr.mxu0 0.0
        %837 = vmatpush1.msra.mxu0 0.0
        %838 = vmatprep.subr.mxu0 0.0
        %839 = vmatpush1.msra.mxu0 0.0
        %840 = vmatprep.subr.mxu0 0.0
        %841 = vmatpush1.msra.mxu0 0.0
        %842 = vmatprep.subr.mxu0 0.0
        %843 = vmatpush1.msra.mxu0 0.0
        %844 = vmatprep.subr.mxu0 0.0
        %845 = vmatpush1.msra.mxu0 0.0
        %846 = vmatprep.subr.mxu0 0.0
        %847 = vmatpush1.msra.mxu0 0.0
        %848 = vmatprep.subr.mxu0 0.0
        %849 = vmatpush1.msra.mxu0 0.0
        %850 = vmatprep.subr.mxu0 0.0
        %851 = vmatpush1.msra.mxu0 0.0
        %852 = vmatprep.subr.mxu0 0.0
        %853 = vmatpush1.msra.mxu0 0.0
        %854 = vmatprep.subr.mxu0 0.0
        %855 = vmatpush1.msra.mxu0 0.0
        %856 = vmatprep.subr.mxu0 0.0
        %857 = vmatpush1.msra.mxu0 0.0
        %858 = vmatprep.subr.mxu0 0.0
        %859 = vmatpush1.msra.mxu0 0.0
        %860 = vmatprep.subr.mxu0 0.0
        %861 = vmatpush1.msra.mxu0 0.0
        %862 = vmatprep.subr.mxu0 0.0
        %863 = vmatpush1.msra.mxu0 0.0
        %864 = vmatprep.subr.mxu0 0.0
        %865 = vmatpush1.msra.mxu0 0.0
        %866 = vmatprep.subr.mxu0 0.0
        %867 = vmatpush1.msra.mxu0 0.0
        %868 = vmatprep.subr.mxu0 0.0
        %869 = vmatpush1.msra.mxu0 0.0
        %870 = vmatprep.subr.mxu0 0.0
        %871 = vmatpush1.msra.mxu0 0.0
        %872 = vmatprep.subr.mxu0 0.0
        %873 = vmatpush1.msra.mxu0 0.0
        %874 = vmatprep.mubr.f32.mxu0 0.0
        %875 = vmatmul.mubr.f32.gmra.mrb[0].mxu0 %v787
        %v876 = vpop.f32.mrb[0].mxu0
        %v877 = vadd.f32 %v784, %v876
        %v878 = vpop.f32.mrb[0].mxu0
        %879 = vmatprep.mubr.f32.mxu0 0.0
        %880 = vmatmul.mubr.f32.gmra.mrb[0].mxu0 %v790
        %v881 = vpop.f32.mrb[0].mxu0
        %v882 = vadd.f32 %v784, %v881
        %v883 = vpop.f32.mrb[0].mxu0
        %884 = vmatprep.mubr.f32.mxu0 0.0
        %885 = vmatmul.mubr.f32.gmra.mrb[0].mxu0 %v793
        %v886 = vpop.f32.mrb[0].mxu0
        %v887 = vadd.f32 %v784, %v886
        %v888 = vpop.f32.mrb[0].mxu0
        %889 = vmatprep.mubr.f32.mxu0 0.0
        %890 = vmatmul.mubr.f32.gmra.mrb[0].mxu0 %v796
        %v891 = vpop.f32.mrb[0].mxu0
        %v892 = vadd.f32 %v784, %v891
        %v893 = vpop.f32.mrb[0].mxu0
        %894 = vmatprep.mubr.f32.mxu0 0.0
        %895 = vmatmul.mubr.f32.gmra.mrb[0].mxu0 %v799
        %v896 = vpop.f32.mrb[0].mxu0
        %v897 = vadd.f32 %v784, %v896
        %v898 = vpop.f32.mrb[0].mxu0
        %899 = vmatprep.mubr.f32.mxu0 0.0
        %900 = vmatmul.mubr.f32.gmra.mrb[0].mxu0 %v802
        %v901 = vpop.f32.mrb[0].mxu0
        %v902 = vadd.f32 %v784, %v901
        %v903 = vpop.f32.mrb[0].mxu0
        %904 = vmatprep.mubr.f32.mxu0 0.0
        %905 = vmatmul.mubr.f32.gmra.mrb[0].mxu0 %v805
        %v906 = vpop.f32.mrb[0].mxu0
        %v907 = vadd.f32 %v784, %v906
        %v908 = vpop.f32.mrb[0].mxu0
        %909 = vmatprep.mubr.f32.mxu0 0.0
        %910 = vmatmul.mubr.f32.gmra.mrb[0].mxu0 %v808
        %v911 = vpop.f32.mrb[0].mxu0
        %v912 = vadd.f32 %v784, %v911
        %v913 = vpop.f32.mrb[0].mxu0
        %914 = vdwg.mxu0
        %v915 = vmax.f32 %v877, 0.0
        %v916 = vmax.f32 %v882, 0.0
        %v917 = vmax.f32 %v887, 0.0
        %v918 = vmax.f32 %v892, 0.0
        %v919 = vmax.f32 %v897, 0.0
        %v920 = vmax.f32 %v902, 0.0
        %v921 = vmax.f32 %v907, 0.0
        %v922 = vmax.f32 %v912, 0.0
        %v923 = vmin.f32 %v915, 6.0
        %v924 = vmin.f32 %v916, 6.0
        %v925 = vmin.f32 %v917, 6.0
        %v926 = vmin.f32 %v918, 6.0
        %v927 = vmin.f32 %v919, 6.0
        %v928 = vmin.f32 %v920, 6.0
        %v929 = vmin.f32 %v921, 6.0
        %v930 = vmin.f32 %v922, 6.0
        %v931 = vadd.f32 %v923, %v297
        %v932 = vadd.f32 %v924, %v298
        %v933 = vadd.f32 %v925, %v299
        %v934 = vadd.f32 %v926, %v300
        %v935 = vadd.f32 %v927, %v301
        %v936 = vadd.f32 %v928, %v302
        %v937 = vadd.f32 %v929, %v303
        %v938 = vadd.f32 %v930, %v304
        %939 = vst.msk [vmem:[%s296] sm:$0xff] %vm313, %v931
        %940 = vst.msk [vmem:[%s296 + $0x8] sm:$0xff] %vm313, %v932
        %941 = vst.msk [vmem:[%s296 + $0x10] sm:$0xff] %vm313, %v933
        %942 = vst.msk [vmem:[%s296 + $0x18] sm:$0xff] %vm313, %v934
        %943 = vst.msk [vmem:[%s296 + $0x20] sm:$0xff] %vm313, %v935
        %944 = vst.msk [vmem:[%s296 + $0x28] sm:$0xff] %vm313, %v936
        %945 = vst.msk [vmem:[%s296 + $0x30] sm:$0xff] %vm313, %v937
        %946 = vst.msk [vmem:[%s296 + $0x38] sm:$0xff] %vm313, %v938
        %s947 = sand.u32 %s184, 1
        %s948 = scalar_lea.sflag [#allocation5], %s947
        %s949 = sand.u32 %s184, 1
        %s950 = smul.addr %s949, 64
        %s951 = scalar_lea.vmem [#allocation6], %s950
        // Predicated region
        $region53: #{tpu_custom_call.1} parent=47 // pred_check
          %p952 = pneg %p194
        $region54: #{tpu_custom_call.1} parent=47 // pred_check_branch
          %954 = sbr.rel (%p952) target = $region56
        $region55: #{tpu_custom_call.1} parent=47 // pred_region
          %s956 = ssub.s32 1024, 1024
          %957 = vsyncadd %s948, %s956
          %s958 = smul.addr %s24, 8
          %s959 = smul.addr %s958, 128
          %s960 = scalar_lea.hbm %s7, %s959
          %s961 = sshll.u32 %s951, 4
          %s962 = int_to_ptr.vmem [resolvable:$true] %s961
          %967 = dma.vmem_to_hbm [thread:$0]  %s962, 1024, %s960, %s948, 128, 128, 8
        $region56: #{tpu_custom_call.1} parent=47 // pred_fallthru
          _
      $region48: #{tpu_custom_call.1} parent=5 // pred_fallthru
        _
      %p968 = scmp.le.s32.totalorder 2, %s19
      // Predicated region
      $region57: #{tpu_custom_call.1} parent=5 // pred_check
        %p969 = pneg %p968
      $region58: #{tpu_custom_call.1} parent=5 // pred_check_branch
        %971 = sbr.rel (%p969) target = $region60
      $region59: #{tpu_custom_call.1} parent=5 // pred_region
        %s972 = ssub.s32 %s19, 2
        // Predicated region
        $region61: #{tpu_custom_call.1} parent=59 // pred_check
          %p973 = pneg %p200
        $region62: #{tpu_custom_call.1} parent=59 // pred_check_branch
          %975 = sbr.rel (%p973) target = $region64
        $region63: #{tpu_custom_call.1} parent=59 // pred_region
          %s976 = sand.u32 %s185, 1
          %s977 = scalar_lea.sflag [#allocation5], %s976
          %s978 = sand.u32 %s185, 1
          %s979 = smul.addr %s978, 64
          %s980 = scalar_lea.vmem [#allocation6], %s979
          %981 = dma.done %s977, 1024
        $region64: #{tpu_custom_call.1} parent=59 // pred_fallthru
          _
      $region60: #{tpu_custom_call.1} parent=5 // pred_fallthru
        _
    $region6: #{tpu_custom_call.1} parent=1 // loop_footer
      %s23 = sadd.s32 1, %s19
    $region7: #{tpu_custom_call.1} parent=1 // loop_footer_branch
      %18 = sbr.rel target = $region3
    $region8: #{tpu_custom_call.1} parent=1 // loop_exit
      _
    %982 = vsyncpa [#allocation4], 1
    %s983 = scalar_lea.sflag [#allocation4], 1
    %984 = vsyncpa %s983, 1
    %985 = vsyncpa [#allocation5], 1
    %s986 = scalar_lea.sflag [#allocation5], 1
    %987 = vsyncpa %s986, 1

</llo_original>
